<compile_context>
chip_gen: v7x
topology: tpu7x:2x2x1
jax: 0.10.0
libtpu: 0.0.40
codegen_flags: <defaults>
</compile_context>

<pallas_src>
import functools

import numpy as np
import jax
import jax.numpy as jnp
from jax.experimental import pallas as pl
from jax.experimental.pallas import tpu as pltpu


_VMEM_LIMIT = 32 * 1024 * 1024   # explicit scoped-VMEM cap (safe on v5e/v6e/v7x)


def _round_up(x, m):
    return ((x + m - 1) // m) * m


# --------------------------------------------------------------------------
# Kernel 1: phase-decomposed upsample matmul + folded BatchNorm + LeakyReLU
# (single pass: BN affine is pre-folded into the weights/bias in the wrapper)
# --------------------------------------------------------------------------
def _up_bn_lrelu_kernel(x_ref, w_ref, b_ref, o_ref):
    # y = (scale*W_phase) @ x + (scale*b + shift)  ==  BatchNorm(ConvTranspose(x))
    y = jnp.dot(w_ref[...], x_ref[...], preferred_element_type=jnp.float32) + b_ref[...]
    o_ref[...] = jnp.where(y >= 0, y, 0.01 * y)      # LeakyReLU(0.01)


def upsample_bn_lrelu(x, w_eff, b_eff, *, tm):
    cin_p, mu = x.shape
    pc_p = w_eff.shape[0]
    nm = mu // tm
    return pl.pallas_call(
        _up_bn_lrelu_kernel,
        out_shape=jax.ShapeDtypeStruct((pc_p, mu), jnp.float32),
        grid_spec=pltpu.PrefetchScalarGridSpec(
            num_scalar_prefetch=0,
            grid=(nm,),
            in_specs=[
                pl.BlockSpec((cin_p, tm), lambda m: (0, m)),
                pl.BlockSpec((pc_p, cin_p), lambda m: (0, 0)),
                pl.BlockSpec((pc_p, 1), lambda m: (0, 0)),
            ],
            out_specs=pl.BlockSpec((pc_p, tm), lambda m: (0, m)),
        ),
        compiler_params=pltpu.CompilerParams(
            dimension_semantics=("parallel",),
            vmem_limit_bytes=_VMEM_LIMIT),
    )(x, w_eff, b_eff)


# --------------------------------------------------------------------------
# Kernel 2: stride-1 tconv via shift-and-accumulate + concat(mirror) + 1x1 conv
# Halo comes from a second BlockSpec on the SAME flattened array (next lanes).
# --------------------------------------------------------------------------
def _conv_concat_compress_kernel(xc_ref, xh_ref, mir_ref, wt_ref, wm_ref, b_ref,
                                 o_ref, *, k, wp, tm):
    # window = this lane tile ++ lane-dense halo (covers every k*k tap shift)
    win = jnp.concatenate([xc_ref[...], xh_ref[...]], axis=1)   # (Cup_p, tm + halo)
    # fused channel-concat + 1x1 compression: start from the mirror branch + bias
    acc = jnp.dot(wm_ref[...], mir_ref[...],
                  preferred_element_type=jnp.float32) + b_ref[...]
    # shift-and-accumulate over the K*K taps (no big sublane-concat temporary)
    for kh in range(k):
        for kw in range(k):
            off = kh * wp + kw                                  # static lane offset
            acc = acc + jnp.dot(wt_ref[kh * k + kw], win[:, off:off + tm],
                                preferred_element_type=jnp.float32)
    o_ref[...] = acc                                            # lane-dense store


def conv_concat_compress(x_flat, mir, w_taps, w_mir, b_eff,
                         *, k, wp, tm, halo, n_tiles):
    cup_p = x_flat.shape[0]
    cmir_p = mir.shape[0]
    kk, cout_p, _ = w_taps.shape
    step = tm // halo                                   # halo block-index stride
    kern = functools.partial(_conv_concat_compress_kernel, k=k, wp=wp, tm=tm)
    return pl.pallas_call(
        kern,
        out_shape=jax.ShapeDtypeStruct((cout_p, n_tiles * tm), jnp.float32),
        grid_spec=pltpu.PrefetchScalarGridSpec(
            num_scalar_prefetch=0,
            grid=(n_tiles,),
            in_specs=[
                pl.BlockSpec((cup_p, tm), lambda b: (0, b)),              # current tile
                pl.BlockSpec((cup_p, halo),
                             lambda b: (0, (b + 1) * step)),              # halo lanes
                pl.BlockSpec((cmir_p, tm), lambda b: (0, b)),
                pl.BlockSpec((kk, cout_p, cup_p), lambda b: (0, 0, 0)),
                pl.BlockSpec((cout_p, cmir_p), lambda b: (0, 0)),
                pl.BlockSpec((cout_p, 1), lambda b: (0, 0)),
            ],
            out_specs=pl.BlockSpec((cout_p, tm), lambda b: (0, b)),
        ),
        compiler_params=pltpu.CompilerParams(
            dimension_semantics=("parallel",),
            vmem_limit_bytes=_VMEM_LIMIT),
    )(x_flat, x_flat, mir, w_taps, w_mir, b_eff)


# --------------------------------------------------------------------------
# TConvBlock forward (not last block: requires a mirror tensor)
# --------------------------------------------------------------------------
def tconv_block_forward(img, mirror, params, upsam_para, tconv_para):
    f32 = jnp.float32
    N, Cin, H, W = img.shape
    kU, sU, pU = upsam_para["kernel_size"], upsam_para["stride"], upsam_para["padding"]
    kT, sT, pT = tconv_para["kernel_size"], tconv_para["stride"], tconv_para["padding"]
    # TODO(synk): upsample path assumes the standard kernel_size==stride, padding==0
    # sub-pixel configuration; second tconv assumes stride==1 (general strides not done).
    assert kU == sU and pU == 0, "upsample implemented for kernel_size==stride, padding==0"
    assert sT == 1 and 0 <= pT <= kT - 1, "second tconv implemented for stride==1"

    w_up = params["up_w"].astype(f32)          # (Cin, Cup, kU, kU)
    b_up = params["up_b"].astype(f32)
    gamma = params["bn_gamma"].astype(f32)
    beta = params["bn_beta"].astype(f32)
    tc_w = params["tc_w"].astype(f32)          # (Cup, Cout3, kT, kT)
    tc_b = params["tc_b"].astype(f32)
    cp_w = params["cp_w"].astype(f32)          # (Cout, Cout3 + Cmir, 1, 1)
    cp_b = params["cp_b"].astype(f32)

    Cup = w_up.shape[1]
    Cout3 = tc_w.shape[1]
    Cout = cp_w.shape[0]
    Cmir = mirror.shape[1]
    nph = sU * sU
    PC = nph * Cup

    # pad channel (sublane) dims to the 8-row f32 vreg granule
    Cin_p = _round_up(Cin, 8)
    Cup_p = _round_up(Cup, 8)
    Cmir_p = _round_up(Cmir, 8)
    Cout_p = _round_up(Cout, 8)
    PC_p = _round_up(PC, 8)

    # ---- Stage 1: fused phase-decomposed upsample + BN(train) + LeakyReLU ----
    Min = N * H * W
    x2d = jnp.transpose(img.astype(f32), (1, 0, 2, 3)).reshape(Cin, Min)

    # rows ordered (kh, kw, cout); w_phase[r, ci] = up_w[ci, cout, kh, kw]
    w_phase = jnp.transpose(w_up, (2, 3, 1, 0)).reshape(PC, Cin)
    b_full = jnp.tile(b_up, nph)                                   # (PC,)

    # BatchNorm batch stats from *input* sufficient statistics (y = W@x + b is linear).
    # TODO(synk): E[y^2]-E[y]^2 in f32 is cancellation-prone for large channel means;
    # switch to a shifted/Welford accumulation if activations can be far from zero.
    s_vec = jnp.sum(x2d, axis=1)                                   # (Cin,)
    gram = x2d @ x2d.T                                             # (Cin, Cin)
    row_ws = w_phase @ s_vec                                       # (PC,)
    row_sum = row_ws + Min * b_full
    row_ssq = (jnp.sum((w_phase @ gram) * w_phase, axis=1)
               + 2.0 * b_full * row_ws + Min * b_full * b_full)
    cnt = float(nph * Min)
    mean = row_sum.reshape(nph, Cup).sum(0) / cnt                  # (Cup,)
    var = row_ssq.reshape(nph, Cup).sum(0) / cnt - mean * mean     # biased batch var
    scale = gamma * jax.lax.rsqrt(var + 1e-5)
    shift = beta - mean * scale
    scale_full = jnp.tile(scale, nph)
    shift_full = jnp.tile(shift, nph)

    # fold BN affine + tconv bias into the matmul: y_bn = (scale*W)@x + (scale*b+shift)
    w_eff = w_phase * scale_full[:, None]
    b_eff1 = scale_full * b_full + shift_full

    tmu = min(1024, _round_up(Min, 128))
    Mu = _round_up(Min, tmu)
    x_in = jnp.pad(x2d, ((0, Cin_p - Cin), (0, Mu - Min)))
    w_eff = jnp.pad(w_eff, ((0, PC_p - PC), (0, Cin_p - Cin)))
    b_eff1 = jnp.pad(b_eff1, (0, PC_p - PC)).reshape(PC_p, 1)

    # TODO(synk): nn.Dropout(p=0) is the identity; random masking for p>0 not implemented.
    up = upsample_bn_lrelu(x_in, w_eff, b_eff1, tm=tmu)[:PC, :Min]

    # interleave sub-pixel phases -> (Cup, N, Ho, Wo)   (one-time JAX glue)
    # TODO(synk): this transpose + the pads below are a full HBM round-trip of the
    # slab; could be absorbed into kernel 2's index_map for production shapes.
    Ho, Wo = sU * H, sU * W
    ximg = jnp.transpose(up.reshape(sU, sU, Cup, N, H, W),
                         (2, 3, 4, 0, 5, 1)).reshape(Cup, N, Ho, Wo)

    # ---- Stage 2: fused stride-1 tconv + concat(mirror) + 1x1 compression ----
    q = kT - 1 - pT                                   # regular-conv equivalent padding
    Hp, Wp = Ho + 2 * q, Wo + 2 * q
    Hout, Wout = Ho + kT - 1 - 2 * pT, Wo + kT - 1 - 2 * pT
    assert mirror.shape == (N, Cmir, Hout, Wout)
    xq = jnp.pad(ximg, ((0, 0), (0, 0), (q, q), (q, q)))
    Mp = N * Hp * Wp
    R = (kT - 1) * (Wp + 1)                           # max tap lane shift
    halo = _round_up(R, 128)                          # lane-dense halo block
    tm = max(min(1024, _round_up(Mp, 128)), halo)
    tm = _round_up(tm, halo)                          # halo block index must divide tm
    L = _round_up(Mp, tm)
    nM = L // tm
    # pad with one extra halo block of zeros so the last tile's halo spec is valid
    xflat = jnp.pad(xq.reshape(Cup, Mp), ((0, Cup_p - Cup), (0, L + halo - Mp)))

    mir = jnp.transpose(mirror.astype(f32), (1, 0, 2, 3))
    mir = jnp.pad(mir, ((0, 0), (0, 0), (0, Hp - Hout), (0, Wp - Wout)))
    mir = jnp.pad(mir.reshape(Cmir, Mp), ((0, Cmir_p - Cmir), (0, L - Mp)))

    # fold the all-linear tconv -> concat -> 1x1 chain into per-tap (Cout, Cup) weights
    w_top = cp_w[:, :Cout3, 0, 0]                     # (Cout, Cout3)
    w_bot = cp_w[:, Cout3:, 0, 0]                     # (Cout, Cmir)
    taps = []
    for kh in range(kT):
        for kw in range(kT):
            wc = tc_w[:, :, kT - 1 - kh, kT - 1 - kw].T   # flipped kernel -> conv tap
            taps.append(w_top @ wc)                       # (Cout, Cup)
    w_taps = jnp.stack(taps, axis=0)                      # (kT*kT, Cout, Cup)
    w_taps = jnp.pad(w_taps, ((0, 0), (0, Cout_p - Cout), (0, Cup_p - Cup)))
    w_mir = jnp.pad(w_bot, ((0, Cout_p - Cout), (0, Cmir_p - Cmir)))
    b_eff = jnp.pad(w_top @ tc_b + cp_b, (0, Cout_p - Cout)).reshape(Cout_p, 1)

    out = conv_concat_compress(xflat, mir, w_taps, w_mir, b_eff,
                               k=kT, wp=Wp, tm=tm, halo=halo, n_tiles=nM)
    out = out[:Cout, :Mp].reshape(Cout, N, Hp, Wp)[:, :, :Hout, :Wout]
    return jnp.transpose(out, (1, 0, 2, 3))


# --------------------------------------------------------------------------
# Pure-JAX reference (PyTorch semantics) for a correctness check
# --------------------------------------------------------------------------
def _ref_conv_transpose(x, w, b, s, p):
    K = w.shape[2]
    wf = jnp.transpose(w[:, :, ::-1, ::-1], (1, 0, 2, 3))  # (Cout, Cin, K, K)
    y = jax.lax.conv_general_dilated(
        x, wf, window_strides=(1, 1),
        padding=[(K - 1 - p, K - 1 - p)] * 2,
        lhs_dilation=(s, s),
        dimension_numbers=("NCHW", "OIHW", "NCHW"))
    return y + b[None, :, None, None]


def ref_forward(img, mirror, params, upsam_para, tconv_para):
    x = _ref_conv_transpose(img, params["up_w"], params["up_b"],
                            upsam_para["stride"], upsam_para["padding"])
    mean = jnp.mean(x, axis=(0, 2, 3), keepdims=True)
    var = jnp.mean((x - mean) ** 2, axis=(0, 2, 3), keepdims=True)
    x = (x - mean) * jax.lax.rsqrt(var + 1e-5)
    x = x * params["bn_gamma"][None, :, None, None] + params["bn_beta"][None, :, None, None]
    x = jnp.where(x >= 0, x, 0.01 * x)
    x = _ref_conv_transpose(x, params["tc_w"], params["tc_b"],
                            tconv_para["stride"], tconv_para["padding"])
    x = jnp.concatenate([x, mirror], axis=1)
    y = jax.lax.conv_general_dilated(
        x, params["cp_w"], (1, 1), "VALID",
        dimension_numbers=("NCHW", "OIHW", "NCHW"))
    return y + params["cp_b"][None, :, None, None]


# --------------------------------------------------------------------------
if __name__ == "__main__":
    batch, in_channel, out_channel = 2, 4, 4
    H = W = 8
    upsam_para = dict(kernel_size=2, stride=2, padding=0)   # 8x8 -> 16x16
    tconv_para = dict(kernel_size=3, stride=1, padding=1)   # 16x16 -> 16x16

    key = jax.random.PRNGKey(0)
    ks = jax.random.split(key, 10)
    kU, kT = upsam_para["kernel_size"], tconv_para["kernel_size"]
    params = {
        "up_w": 0.1 * jax.random.normal(ks[0], (in_channel, in_channel, kU, kU), jnp.float32),
        "up_b": 0.1 * jax.random.normal(ks[1], (in_channel,), jnp.float32),
        "bn_gamma": 1.0 + 0.1 * jax.random.normal(ks[2], (in_channel,), jnp.float32),
        "bn_beta": 0.1 * jax.random.normal(ks[3], (in_channel,), jnp.float32),
        "tc_w": 0.1 * jax.random.normal(ks[4], (in_channel, out_channel, kT, kT), jnp.float32),
        "tc_b": 0.1 * jax.random.normal(ks[5], (out_channel,), jnp.float32),
        "cp_w": 0.1 * jax.random.normal(ks[6], (out_channel, 2 * out_channel, 1, 1), jnp.float32),
        "cp_b": 0.1 * jax.random.normal(ks[7], (out_channel,), jnp.float32),
    }

    img = jax.random.normal(ks[8], (batch, in_channel, H, W), jnp.float32)
    mirror = jax.random.normal(ks[9], (batch, out_channel, 2 * H, 2 * W), jnp.float32)

    out = tconv_block_forward(img, mirror, params, upsam_para, tconv_para)
    out = jax.block_until_ready(out)

    ref = ref_forward(img, mirror, params, upsam_para, tconv_para)
    np.testing.assert_allclose(np.asarray(out), np.asarray(ref), rtol=2e-3, atol=2e-3)
    assert out.shape == (batch, out_channel, 2 * H, 2 * W)

    print("KERNEL_OK")
</pallas_src>

<mosaic_0001>
module attributes {stable_mosaic.version = 11 : i64} {
  func.func @_up_bn_lrelu_kernel(%arg0: i32, %arg1: memref<8x128xf32, #tpu.memory_space<vmem>>, %arg2: memref<16x8xf32, #tpu.memory_space<vmem>>, %arg3: memref<16x1xf32, #tpu.memory_space<vmem>>, %arg4: memref<16x128xf32, #tpu.memory_space<vmem>>) attributes {dimension_semantics = [#tpu.dimension_semantics<parallel>], iteration_bounds = array<i64: 1>, scalar_prefetch = 0 : i64, scratch_operands = 0 : i64, tpu.core_type = #tpu.core_type<tc>, window_params = [{transform_indices = @transform_0, window_bounds = array<i64: 8, 128>}, {pipeline_mode = #tpu.pipeline_mode<synchronous>, transform_indices = @transform_1, window_bounds = array<i64: 16, 8>}, {pipeline_mode = #tpu.pipeline_mode<synchronous>, transform_indices = @transform_2, window_bounds = array<i64: 16, 1>}, {transform_indices = @transform_3, window_bounds = array<i64: 16, 128>}]} {
    %c0 = arith.constant 0 : index
    %c0_0 = arith.constant 0 : index
    %0 = vector.load %arg2[%c0, %c0_0] : memref<16x8xf32, #tpu.memory_space<vmem>>, vector<16x8xf32>
    %c0_1 = arith.constant 0 : index
    %c0_2 = arith.constant 0 : index
    %1 = vector.load %arg1[%c0_1, %c0_2] : memref<8x128xf32, #tpu.memory_space<vmem>>, vector<8x128xf32>
    %cst = arith.constant dense<0.000000e+00> : vector<16x128xf32>
    %2 = tpu.matmul %0, %1, %cst {dimension_numbers = #tpu.dot_dimension_numbers<[1], [0], [0], [1], [0, 0, 1, 1], [], []>} : vector<16x8xf32>, vector<8x128xf32>, vector<16x128xf32> -> vector<16x128xf32>
    %c0_3 = arith.constant 0 : index
    %c0_4 = arith.constant 0 : index
    %3 = vector.load %arg3[%c0_3, %c0_4] : memref<16x1xf32, #tpu.memory_space<vmem>>, vector<16x1xf32>
    %4 = vector.broadcast %3 : vector<16x1xf32> to vector<16x128xf32>
    %5 = arith.addf %2, %4 : vector<16x128xf32>
    %cst_5 = arith.constant 0.000000e+00 : f32
    %6 = vector.broadcast %cst_5 : f32 to vector<16x128xf32>
    %7 = arith.cmpf oge, %5, %6 : vector<16x128xf32>
    %cst_6 = arith.constant 0.00999999977 : f32
    %8 = vector.broadcast %cst_6 : f32 to vector<16x128xf32>
    %9 = arith.mulf %8, %5 : vector<16x128xf32>
    %10 = arith.select %7, %5, %9 : vector<16x128xi1>, vector<16x128xf32>
    %c0_7 = arith.constant 0 : index
    %c0_8 = arith.constant 0 : index
    %11 = vector.load %arg4[%c0_7, %c0_8] : memref<16x128xf32, #tpu.memory_space<vmem>>, vector<16x128xf32>
    tpu.vector_store %arg4[%c0_7, %c0_8], %10 {strides = array<i32>} : memref<16x128xf32, #tpu.memory_space<vmem>>, vector<16x128xf32>,
    return
  }
  func.func @transform_0(%arg0: i32) -> (i32, i32) {
    %c0_i32 = arith.constant 0 : i32
    %c0_i32_0 = arith.constant 0 : i32
    return %c0_i32, %arg0 : i32, i32
  }
  func.func @transform_1(%arg0: i32) -> (i32, i32) {
    %c0_i32 = arith.constant 0 : i32
    %c0_i32_0 = arith.constant 0 : i32
    %c0_i32_1 = arith.constant 0 : i32
    return %c0_i32, %c0_i32_0 : i32, i32
  }
  func.func @transform_2(%arg0: i32) -> (i32, i32) {
    %c0_i32 = arith.constant 0 : i32
    %c0_i32_0 = arith.constant 0 : i32
    %c0_i32_1 = arith.constant 0 : i32
    return %c0_i32, %c0_i32_0 : i32, i32
  }
  func.func @transform_3(%arg0: i32) -> (i32, i32) {
    %c0_i32 = arith.constant 0 : i32
    %c0_i32_0 = arith.constant 0 : i32
    return %c0_i32, %arg0 : i32, i32
  }
}

</mosaic_0001>

<llo_original>
// kernel: tpu_custom_call.1
$region0: #{tpu_custom_call.1}
  #allocation0 [shape = 'u32[]', space=smem, size = 0x4, offset = 0x4, fixed_abs, tag = 'smem constant byte address 0x4 - core index']
  #allocation1 [shape = 'u32[144,128]{1,0:T(1,128)}', space=vmem, size = 0x12000, scoped, tag = 'internal scratch']
  %s0 = inlined_call_operand.vmem [shape: f32[8,128], index: 0, kind: input, shape index: {}]
  %s1 = inlined_call_operand.vmem [shape: f32[16,8], index: 1, kind: input, shape index: {}]
  %s2 = inlined_call_operand.vmem [shape: f32[16,1], index: 2, kind: input, shape index: {}]
  %s3 = inlined_call_operand.hbm [shape: f32[16,128], index: 3, kind: output, shape index: {}]
  %s4 = sld [smem:[#allocation0]]
  $region22: #{tpu_custom_call.1} parent=0
    _
  %s6 = ssub.s32 1, %s4
  %s7 = scalar_select 0, %s6, %s4
  $region1: #{tpu_custom_call.1} parent=0
    #allocation2 [shape = 'u8[8192]{0}', space=vmem, size = 0x2000, scoped, tag = 'output window, operand 0, single buffered']
    #allocation3 [shape = 's32[1]{0}', space=sflag, size = 0x4, scoped, tag = 'scoped memory for tpu_custom_call.1']
    %8 = vsyncpa [#allocation3], 0
    // Predicated region
    $region2: #{tpu_custom_call.1} parent=1 // pred_check
      _
    $region3: #{tpu_custom_call.1} parent=1 // pred_check_branch
      %10 = sbr.rel (0) target = $region5
    $region4: #{tpu_custom_call.1} parent=1 // pred_region
      _
    $region5: #{tpu_custom_call.1} parent=1 // pred_fallthru
      _
    // Predicated region
    $region6: #{tpu_custom_call.1} parent=1 // pred_check
      _
    $region7: #{tpu_custom_call.1} parent=1 // pred_check_branch
      %12 = sbr.rel (0) target = $region9
    $region8: #{tpu_custom_call.1} parent=1 // pred_region
      _
    $region9: #{tpu_custom_call.1} parent=1 // pred_fallthru
      _
    // Predicated region
    $region10: #{tpu_custom_call.1} parent=1 // pred_check
      _
    $region11: #{tpu_custom_call.1} parent=1 // pred_check_branch
      %14 = sbr.rel (0) target = $region13
    $region12: #{tpu_custom_call.1} parent=1 // pred_region
      _
    $region13: #{tpu_custom_call.1} parent=1 // pred_fallthru
      _
    %v15 = vld [vmem:[%s1] sm:$0xff]
    %v16 = vld [vmem:[%s1 + $0x8] sm:$0xff]
    %v17 = vld [vmem:[%s0] sm:$0xff]
    %v18 = vld [vmem:[%s2] sm:$0xff]
    %v19 = vld [vmem:[%s2 + $0x8] sm:$0xff]
    %21 = vset.pattern.permute.xlu0 0
    %22 = vperm.xlu0 %21, %v18
    %v23 = vpop.permute.xlu0 %22
    %26 = vset.pattern.permute.xlu0 0
    %27 = vperm.xlu0 %26, %v19
    %v28 = vpop.permute.xlu0 %27
    %vm30 = vcmask 64512
    %v32 = vsel %vm30, %v15, 0
    %v35 = vsel %vm30, %v16, 0
    %37 = vmatprep.subr.mxu0 0.0
    %38 = vmatpush1.msra.mxu0 %v17
    %39 = vmatprep.subr.mxu0 0.0
    %40 = vmatpush1.msra.mxu0 0.0
    %41 = vmatprep.subr.mxu0 0.0
    %42 = vmatpush1.msra.mxu0 0.0
    %43 = vmatprep.subr.mxu0 0.0
    %44 = vmatpush1.msra.mxu0 0.0
    %45 = vmatprep.subr.mxu0 0.0
    %46 = vmatpush1.msra.mxu0 0.0
    %47 = vmatprep.subr.mxu0 0.0
    %48 = vmatpush1.msra.mxu0 0.0
    %49 = vmatprep.subr.mxu0 0.0
    %50 = vmatpush1.msra.mxu0 0.0
    %51 = vmatprep.subr.mxu0 0.0
    %52 = vmatpush1.msra.mxu0 0.0
    %53 = vmatprep.subr.mxu0 0.0
    %54 = vmatpush1.msra.mxu0 0.0
    %55 = vmatprep.subr.mxu0 0.0
    %56 = vmatpush1.msra.mxu0 0.0
    %57 = vmatprep.subr.mxu0 0.0
    %58 = vmatpush1.msra.mxu0 0.0
    %59 = vmatprep.subr.mxu0 0.0
    %60 = vmatpush1.msra.mxu0 0.0
    %61 = vmatprep.subr.mxu0 0.0
    %62 = vmatpush1.msra.mxu0 0.0
    %63 = vmatprep.subr.mxu0 0.0
    %64 = vmatpush1.msra.mxu0 0.0
    %65 = vmatprep.subr.mxu0 0.0
    %66 = vmatpush1.msra.mxu0 0.0
    %67 = vmatprep.subr.mxu0 0.0
    %68 = vmatpush1.msra.mxu0 0.0
    %69 = vmatprep.subr.mxu0 0.0
    %70 = vmatpush1.msra.mxu0 0.0
    %71 = vmatprep.subr.mxu0 0.0
    %72 = vmatpush1.msra.mxu0 0.0
    %73 = vmatprep.subr.mxu0 0.0
    %74 = vmatpush1.msra.mxu0 0.0
    %75 = vmatprep.subr.mxu0 0.0
    %76 = vmatpush1.msra.mxu0 0.0
    %77 = vmatprep.subr.mxu0 0.0
    %78 = vmatpush1.msra.mxu0 0.0
    %79 = vmatprep.subr.mxu0 0.0
    %80 = vmatpush1.msra.mxu0 0.0
    %81 = vmatprep.subr.mxu0 0.0
    %82 = vmatpush1.msra.mxu0 0.0
    %83 = vmatprep.subr.mxu0 0.0
    %84 = vmatpush1.msra.mxu0 0.0
    %85 = vmatprep.subr.mxu0 0.0
    %86 = vmatpush1.msra.mxu0 0.0
    %87 = vmatprep.subr.mxu0 0.0
    %88 = vmatpush1.msra.mxu0 0.0
    %89 = vmatprep.subr.mxu0 0.0
    %90 = vmatpush1.msra.mxu0 0.0
    %91 = vmatprep.subr.mxu0 0.0
    %92 = vmatpush1.msra.mxu0 0.0
    %93 = vmatprep.subr.mxu0 0.0
    %94 = vmatpush1.msra.mxu0 0.0
    %95 = vmatprep.subr.mxu0 0.0
    %96 = vmatpush1.msra.mxu0 0.0
    %97 = vmatprep.subr.mxu0 0.0
    %98 = vmatpush1.msra.mxu0 0.0
    %99 = vmatprep.subr.mxu0 0.0
    %100 = vmatpush1.msra.mxu0 0.0
    %101 = vmatprep.mubr.f32.mxu0 0.0
    %102 = vmatmul.mubr.f32.gmra.mrb[0].mxu0 %v32
    %v103 = vpop.f32.mrb[0].mxu0
    %v104 = vadd.f32 %v23, %v103
    %v105 = vpop.f32.mrb[0].mxu0
    %106 = vmatprep.mubr.f32.mxu0 0.0
    %107 = vmatmul.mubr.f32.gmra.mrb[0].mxu0 %v35
    %v108 = vpop.f32.mrb[0].mxu0
    %v109 = vadd.f32 %v28, %v108
    %v110 = vpop.f32.mrb[0].mxu0
    %111 = vdwg.mxu0
    %vm112 = vcmp.ge.f32.partialorder %v104, 0.0
    %vm113 = vcmp.ge.f32.partialorder %v109, 0.0
    %v114 = vmul.f32 %v104, 0.01
    %v115 = vmul.f32 %v109, 0.01
    %v116 = vsel %vm112, %v104, %v114
    %v117 = vsel %vm113, %v109, %v115
    %118 = vst [vmem:[#allocation2] sm:$0xff] %v116
    %119 = vst [vmem:[#allocation2 + $0x8] sm:$0xff] %v117
    // Predicated region
    $region14: #{tpu_custom_call.1} parent=1 // pred_check
      _
    $region15: #{tpu_custom_call.1} parent=1 // pred_check_branch
      %121 = sbr.rel (0) target = $region17
    $region16: #{tpu_custom_call.1} parent=1 // pred_region
      %s123 = ssub.s32 256, 256
      %124 = vsyncadd [#allocation3], %s123
      %s125 = sshll.u32 [#allocation2], 4
      %s126 = int_to_ptr.vmem [resolvable:$true] %s125
      %131 = dma.vmem_to_hbm [thread:$0]  %s126, 256, %s3, [#allocation3], 128, 128, 8
    $region17: #{tpu_custom_call.1} parent=1 // pred_fallthru
      _
    // Predicated region
    $region18: #{tpu_custom_call.1} parent=1 // pred_check
      _
    $region19: #{tpu_custom_call.1} parent=1 // pred_check_branch
      %133 = sbr.rel (0) target = $region21
    $region20: #{tpu_custom_call.1} parent=1 // pred_region
      %134 = dma.done [#allocation3], 256
    $region21: #{tpu_custom_call.1} parent=1 // pred_fallthru
      _
    %135 = vsyncpa [#allocation3], 1

</llo_original>
